<compile_context>
chip_gen: v5e
topology: v5e:2x2
jax: 0.10.0
libtpu: 0.0.40
codegen_flags: <defaults>
</compile_context>

<pallas_src>
import functools
import math

import jax
import jax.numpy as jnp
from jax.experimental import pallas as pl
from jax.experimental.pallas import tpu as pltpu


# ---------------------------------------------------------------------------
# Activation (static Python-level dispatch; only the selected branch is traced)
# ---------------------------------------------------------------------------

def _apply_activation(y, activation):
    if activation is None:
        return y
    if activation in ("silu", "swish"):
        # exp and approx reciprocal both go to the (otherwise idle) EUP slot.
        return y * pl.reciprocal(1.0 + jnp.exp(-y), approx=True)
    if activation == "gelu":  # exact erf GELU (torch nn.GELU default)
        return 0.5 * y * (1.0 + jax.lax.erf(y * (1.0 / math.sqrt(2.0))))
    if activation == "mish":
        sp = jnp.where(y > 20.0, y, jnp.log1p(jnp.exp(jnp.minimum(y, 20.0))))
        return y * jnp.tanh(sp)
    raise ValueError(f"Unsupported activation: {activation}")


# ---------------------------------------------------------------------------
# Fused kernel: (x [+ cond @ Wc]) -> act(x @ W1 + b1) -> post_act(h @ W2 + b2)
# Grid: (num_n_tiles,) over linear_2's output dim only.
# ---------------------------------------------------------------------------

def _fused_timestep_embedding_kernel(*refs, act_fn, post_act_fn, has_cond):
    if has_cond:
        (x_ref, c_ref, wc_ref, w1_ref, b1_ref, w2_ref, b2_ref,
         o_ref, h_ref) = refs
    else:
        (x_ref, w1_ref, b1_ref, w2_ref, b2_ref, o_ref, h_ref) = refs

    j = pl.program_id(0)

    # linear_1 (+ optional cond_proj add) computed once; h stays in VMEM scratch.
    # Safe because the single grid axis is "arbitrary" (sequential on one core).
    @pl.when(j == 0)
    def _():
        x = x_ref[...]                                   # (B, C_in) f32
        if has_cond:
            x = x + jnp.dot(c_ref[...].astype(wc_ref.dtype), wc_ref[...],
                            preferred_element_type=jnp.float32)
        h = jnp.dot(x.astype(w1_ref.dtype), w1_ref[...],
                    preferred_element_type=jnp.float32) + b1_ref[...]
        h_ref[...] = _apply_activation(h, act_fn)        # (B, D1) f32

    # linear_2 on the current N tile; bias + post_act fused into the epilogue.
    y = jnp.dot(h_ref[...].astype(w2_ref.dtype), w2_ref[...],
                preferred_element_type=jnp.float32) + b2_ref[...]
    o_ref[...] = _apply_activation(y, post_act_fn).astype(o_ref.dtype)


def _pick_n_tile(n):
    """Multiple of 128 dividing n, <= 512, preferring >= 2 tiles (so the W2 DMA
    double-buffers against compute).  Falls back to the full dim (always legal)
    when n is not a multiple of 128 — fine for TimestepEmbedding-sized N."""
    if n % 128 != 0:
        return n
    cap = min(512, n)
    if n >= 256:
        cap = min(cap, n // 2)
    best = n if cap < 128 else 128
    t = 128
    while t <= cap:
        if n % t == 0:
            best = t
        t += 128
    return best


# ---------------------------------------------------------------------------
# TimestepEmbedding forward (semantics of the PyTorch module)
# ---------------------------------------------------------------------------

def timestep_embedding_fwd(params, sample, condition=None,
                           act_fn="silu", post_act_fn=None):
    """sample: (B, in_channels) -> (B, time_embed_dim_out, 1, 1)."""
    x = sample.astype(jnp.float32)
    w1 = params["linear_1_w"]
    w2 = params["linear_2_w"]
    wc = params.get("cond_proj_w", None)
    has_cond = (condition is not None) and (wc is not None)

    B, c_in = x.shape
    k1, d1 = w1.shape
    k2, d2 = w2.shape
    assert c_in == k1 and d1 == k2, (x.shape, w1.shape, w2.shape)

    b1 = params["linear_1_b"].reshape(1, d1).astype(jnp.float32)
    b2 = params["linear_2_b"].reshape(1, d2).astype(jnp.float32)

    tn = _pick_n_tile(d2)
    grid = (d2 // tn,)

    in_specs = [pl.BlockSpec((B, c_in), lambda j: (0, 0))]     # sample (resident)
    args = [x]
    if has_cond:
        cond = condition.astype(jnp.float32)
        c_cond = cond.shape[1]
        in_specs += [
            pl.BlockSpec((B, c_cond), lambda j: (0, 0)),       # condition
            pl.BlockSpec((c_cond, c_in), lambda j: (0, 0)),    # cond_proj_w
        ]
        args += [cond, wc]
    in_specs += [
        pl.BlockSpec((c_in, d1), lambda j: (0, 0)),            # W1 (full, resident)
        pl.BlockSpec((1, d1), lambda j: (0, 0)),               # b1
        pl.BlockSpec((d1, tn), lambda j: (0, j)),              # W2 (full-K slab per N tile)
        pl.BlockSpec((1, tn), lambda j: (0, j)),               # b2
    ]
    args += [w1, b1, w2, b2]

    kernel = functools.partial(_fused_timestep_embedding_kernel,
                               act_fn=act_fn, post_act_fn=post_act_fn,
                               has_cond=has_cond)

    out = pl.pallas_call(
        kernel,
        out_shape=jax.ShapeDtypeStruct((B, d2), jnp.float32),
        grid=grid,
        in_specs=in_specs,
        out_specs=pl.BlockSpec((B, tn), lambda j: (0, j)),
        scratch_shapes=[pltpu.VMEM((B, d1), jnp.float32)],      # h, resident across N tiles
        compiler_params=pltpu.CompilerParams(
            # Sequential: every N-tile step reads the h scratch written at j == 0.
            dimension_semantics=("arbitrary",),
            # Tiny footprint here; 48 MiB keeps headroom for realistic embed dims
            # while staying under v7x's 64 MiB physical VMEM.
            vmem_limit_bytes=48 * 1024 * 1024,
        ),
    )(*args)

    # The PyTorch module keeps the trailing 1x1 spatial dims on its output.
    return out[:, :, None, None]


# ---------------------------------------------------------------------------
# Deterministic synthetic parameters.  Weights are stored in bf16 ONCE here
# (MXU input dtype); biases stay f32 as (1, D) rows, matmul-ready.
# ---------------------------------------------------------------------------

def init_master_params(key, in_channels, time_embed_dim, out_dim=None,
                       cond_proj_dim=None):
    time_embed_dim_out = out_dim if out_dim is not None else time_embed_dim
    ks = jax.random.split(key, 5)
    s = 0.05
    p = dict(
        linear_1_w=s * jax.random.normal(ks[0], (in_channels, time_embed_dim), jnp.float32),
        linear_1_b=s * jax.random.normal(ks[1], (time_embed_dim,), jnp.float32),
        linear_2_w=s * jax.random.normal(ks[2], (time_embed_dim, time_embed_dim_out), jnp.float32),
        linear_2_b=s * jax.random.normal(ks[3], (time_embed_dim_out,), jnp.float32),
    )
    if cond_proj_dim is not None:
        p["cond_proj_w"] = s * jax.random.normal(
            ks[4], (cond_proj_dim, in_channels), jnp.float32)
    else:
        p["cond_proj_w"] = None
    return p


def prepare_kernel_params(master):
    """One-time dtype prep: weights -> bf16, biases -> (1, D) f32."""
    p = dict(
        linear_1_w=master["linear_1_w"].astype(jnp.bfloat16),
        linear_1_b=master["linear_1_b"].reshape(1, -1).astype(jnp.float32),
        linear_2_w=master["linear_2_w"].astype(jnp.bfloat16),
        linear_2_b=master["linear_2_b"].reshape(1, -1).astype(jnp.float32),
    )
    if master.get("cond_proj_w") is not None:
        p["cond_proj_w"] = master["cond_proj_w"].astype(jnp.bfloat16)
    else:
        p["cond_proj_w"] = None
    return p


# ---------------------------------------------------------------------------

if __name__ == "__main__":
    # Small shapes consistent with the module (batch of timesteps, channel embeddings).
    B, in_channels, time_embed_dim, cond_dim = 2, 32, 128, 32

    key = jax.random.PRNGKey(0)
    k1, k2, k3 = jax.random.split(key, 3)
    sample = jax.random.normal(k1, (B, in_channels), jnp.float32)
    condition = jax.random.normal(k2, (B, cond_dim), jnp.float32)

    master = init_master_params(k3, in_channels, time_embed_dim, out_dim=None,
                                cond_proj_dim=cond_dim)
    params = prepare_kernel_params(master)   # bf16 weights stored once, up front

    fwd = jax.jit(functools.partial(timestep_embedding_fwd,
                                    act_fn="silu", post_act_fn=None))
    out = fwd(params, sample, condition)
    jax.block_until_ready(out)

    # Pure-JAX f32 reference using the same bf16-rounded weights (weight storage
    # precision is intentional; this isolates the kernel's own numerics).
    def ref(p, s_, c_):
        x = s_ + c_ @ p["cond_proj_w"].astype(jnp.float32)
        h = x @ p["linear_1_w"].astype(jnp.float32) + p["linear_1_b"]
        h = h * jax.nn.sigmoid(h)
        o = h @ p["linear_2_w"].astype(jnp.float32) + p["linear_2_b"]
        return o[:, :, None, None]

    expected = ref(params, sample, condition)
    assert out.shape == (B, time_embed_dim, 1, 1), out.shape
    max_err = float(jnp.max(jnp.abs(out - expected)))
    assert jnp.allclose(out, expected, atol=3e-2, rtol=3e-2), max_err
    print("KERNEL_OK")
</pallas_src>

<mosaic_0001>
module attributes {stable_mosaic.version = 11 : i64} {
  func.func @_fused_timestep_embedding_kernel(%arg0: i32, %arg1: memref<2x32xf32, #tpu.memory_space<vmem>>, %arg2: memref<2x32xf32, #tpu.memory_space<vmem>>, %arg3: memref<32x32xbf16, #tpu.memory_space<vmem>>, %arg4: memref<32x128xbf16, #tpu.memory_space<vmem>>, %arg5: memref<1x128xf32, #tpu.memory_space<vmem>>, %arg6: memref<128x128xbf16, #tpu.memory_space<vmem>>, %arg7: memref<1x128xf32, #tpu.memory_space<vmem>>, %arg8: memref<2x128xf32, #tpu.memory_space<vmem>>, %arg9: memref<2x128xf32, #tpu.memory_space<vmem>>) attributes {dimension_semantics = [#tpu.dimension_semantics<arbitrary>], iteration_bounds = array<i64: 1>, scalar_prefetch = 0 : i64, scratch_operands = 1 : i64, tpu.core_type = #tpu.core_type<tc>, window_params = [{pipeline_mode = #tpu.pipeline_mode<synchronous>, transform_indices = @transform_0, window_bounds = array<i64: 2, 32>}, {pipeline_mode = #tpu.pipeline_mode<synchronous>, transform_indices = @transform_1, window_bounds = array<i64: 2, 32>}, {pipeline_mode = #tpu.pipeline_mode<synchronous>, transform_indices = @transform_2, window_bounds = array<i64: 32, 32>}, {pipeline_mode = #tpu.pipeline_mode<synchronous>, transform_indices = @transform_3, window_bounds = array<i64: 32, 128>}, {pipeline_mode = #tpu.pipeline_mode<synchronous>, transform_indices = @transform_4, window_bounds = array<i64: 1, 128>}, {transform_indices = @transform_5, window_bounds = array<i64: 128, 128>}, {transform_indices = @transform_6, window_bounds = array<i64: 1, 128>}, {transform_indices = @transform_7, window_bounds = array<i64: 2, 128>}]} {
    %c0_i32 = arith.constant 0 : i32
    %0 = arith.cmpi eq, %arg0, %c0_i32 : i32
    %1 = arith.extui %0 : i1 to i32
    %c0_i32_0 = arith.constant 0 : i32
    %2 = arith.cmpi ne, %1, %c0_i32_0 : i32
    scf.if %2 {
      %c0_8 = arith.constant 0 : index
      %c0_9 = arith.constant 0 : index
      %11 = vector.load %arg1[%c0_8, %c0_9] : memref<2x32xf32, #tpu.memory_space<vmem>>, vector<2x32xf32>
      %c0_10 = arith.constant 0 : index
      %c0_11 = arith.constant 0 : index
      %12 = vector.load %arg2[%c0_10, %c0_11] : memref<2x32xf32, #tpu.memory_space<vmem>>, vector<2x32xf32>
      %13 = arith.truncf %12 : vector<2x32xf32> to vector<2x32xbf16>
      %c0_12 = arith.constant 0 : index
      %c0_13 = arith.constant 0 : index
      %14 = vector.load %arg3[%c0_12, %c0_13] : memref<32x32xbf16, #tpu.memory_space<vmem>>, vector<32x32xbf16>
      %cst_14 = arith.constant dense<0.000000e+00> : vector<2x32xf32>
      %15 = tpu.matmul %13, %14, %cst_14 {dimension_numbers = #tpu.dot_dimension_numbers<[1], [0], [0], [1], [0, 0, 1, 1], [], []>} : vector<2x32xbf16>, vector<32x32xbf16>, vector<2x32xf32> -> vector<2x32xf32>
      %16 = arith.addf %11, %15 : vector<2x32xf32>
      %17 = arith.truncf %16 : vector<2x32xf32> to vector<2x32xbf16>
      %c0_15 = arith.constant 0 : index
      %c0_16 = arith.constant 0 : index
      %18 = vector.load %arg4[%c0_15, %c0_16] : memref<32x128xbf16, #tpu.memory_space<vmem>>, vector<32x128xbf16>
      %cst_17 = arith.constant dense<0.000000e+00> : vector<2x128xf32>
      %19 = tpu.matmul %17, %18, %cst_17 {dimension_numbers = #tpu.dot_dimension_numbers<[1], [0], [0], [1], [0, 0, 1, 1], [], []>} : vector<2x32xbf16>, vector<32x128xbf16>, vector<2x128xf32> -> vector<2x128xf32>
      %c0_18 = arith.constant 0 : index
      %c0_19 = arith.constant 0 : index
      %20 = vector.load %arg5[%c0_18, %c0_19] : memref<1x128xf32, #tpu.memory_space<vmem>>, vector<1x128xf32>
      %21 = vector.broadcast %20 : vector<1x128xf32> to vector<2x128xf32>
      %22 = arith.addf %19, %21 : vector<2x128xf32>
      %cst_20 = arith.constant 0.000000e+00 : f32
      %23 = vector.broadcast %cst_20 : f32 to vector<2x128xf32>
      %24 = arith.subf %23, %22 : vector<2x128xf32>
      %25 = math.exp %24 : vector<2x128xf32>
      %cst_21 = arith.constant 1.000000e+00 : f32
      %26 = vector.broadcast %cst_21 : f32 to vector<2x128xf32>
      %27 = arith.addf %26, %25 : vector<2x128xf32>
      %28 = tpu.reciprocal %27 {approx = true} : vector<2x128xf32> -> vector<2x128xf32>
      %29 = arith.mulf %22, %28 : vector<2x128xf32>
      %c0_22 = arith.constant 0 : index
      %c0_23 = arith.constant 0 : index
      %30 = vector.load %arg9[%c0_22, %c0_23] : memref<2x128xf32, #tpu.memory_space<vmem>>, vector<2x128xf32>
      tpu.vector_store %arg9[%c0_22, %c0_23], %29 {strides = array<i32>} : memref<2x128xf32, #tpu.memory_space<vmem>>, vector<2x128xf32>,
    } else {
    }
    %c0 = arith.constant 0 : index
    %c0_1 = arith.constant 0 : index
    %3 = vector.load %arg9[%c0, %c0_1] : memref<2x128xf32, #tpu.memory_space<vmem>>, vector<2x128xf32>
    %4 = arith.truncf %3 : vector<2x128xf32> to vector<2x128xbf16>
    %c0_2 = arith.constant 0 : index
    %c0_3 = arith.constant 0 : index
    %5 = vector.load %arg6[%c0_2, %c0_3] : memref<128x128xbf16, #tpu.memory_space<vmem>>, vector<128x128xbf16>
    %cst = arith.constant dense<0.000000e+00> : vector<2x128xf32>
    %6 = tpu.matmul %4, %5, %cst {dimension_numbers = #tpu.dot_dimension_numbers<[1], [0], [0], [1], [0, 0, 1, 1], [], []>} : vector<2x128xbf16>, vector<128x128xbf16>, vector<2x128xf32> -> vector<2x128xf32>
    %c0_4 = arith.constant 0 : index
    %c0_5 = arith.constant 0 : index
    %7 = vector.load %arg7[%c0_4, %c0_5] : memref<1x128xf32, #tpu.memory_space<vmem>>, vector<1x128xf32>
    %8 = vector.broadcast %7 : vector<1x128xf32> to vector<2x128xf32>
    %9 = arith.addf %6, %8 : vector<2x128xf32>
    %c0_6 = arith.constant 0 : index
    %c0_7 = arith.constant 0 : index
    %10 = vector.load %arg8[%c0_6, %c0_7] : memref<2x128xf32, #tpu.memory_space<vmem>>, vector<2x128xf32>
    tpu.vector_store %arg8[%c0_6, %c0_7], %9 {strides = array<i32>} : memref<2x128xf32, #tpu.memory_space<vmem>>, vector<2x128xf32>,
    return
  }
  func.func @transform_0(%arg0: i32) -> (i32, i32) {
    %c0_i32 = arith.constant 0 : i32
    %c0_i32_0 = arith.constant 0 : i32
    %c0_i32_1 = arith.constant 0 : i32
    return %c0_i32, %c0_i32_0 : i32, i32
  }
  func.func @transform_1(%arg0: i32) -> (i32, i32) {
    %c0_i32 = arith.constant 0 : i32
    %c0_i32_0 = arith.constant 0 : i32
    %c0_i32_1 = arith.constant 0 : i32
    return %c0_i32, %c0_i32_0 : i32, i32
  }
  func.func @transform_2(%arg0: i32) -> (i32, i32) {
    %c0_i32 = arith.constant 0 : i32
    %c0_i32_0 = arith.constant 0 : i32
    %c0_i32_1 = arith.constant 0 : i32
    return %c0_i32, %c0_i32_0 : i32, i32
  }
  func.func @transform_3(%arg0: i32) -> (i32, i32) {
    %c0_i32 = arith.constant 0 : i32
    %c0_i32_0 = arith.constant 0 : i32
    %c0_i32_1 = arith.constant 0 : i32
    return %c0_i32, %c0_i32_0 : i32, i32
  }
  func.func @transform_4(%arg0: i32) -> (i32, i32) {
    %c0_i32 = arith.constant 0 : i32
    %c0_i32_0 = arith.constant 0 : i32
    %c0_i32_1 = arith.constant 0 : i32
    return %c0_i32, %c0_i32_0 : i32, i32
  }
  func.func @transform_5(%arg0: i32) -> (i32, i32) {
    %c0_i32 = arith.constant 0 : i32
    %c0_i32_0 = arith.constant 0 : i32
    return %c0_i32, %arg0 : i32, i32
  }
  func.func @transform_6(%arg0: i32) -> (i32, i32) {
    %c0_i32 = arith.constant 0 : i32
    %c0_i32_0 = arith.constant 0 : i32
    return %c0_i32, %arg0 : i32, i32
  }
  func.func @transform_7(%arg0: i32) -> (i32, i32) {
    %c0_i32 = arith.constant 0 : i32
    %c0_i32_0 = arith.constant 0 : i32
    return %c0_i32, %arg0 : i32, i32
  }
}

</mosaic_0001>

<llo_original>
// kernel: timestep_embedding_fwd.1
$region0: #{timestep_embedding_fwd.1}
  #allocation0 [shape = 'u32[]', space=smem, size = 0x4, offset = 0x4, fixed_abs, tag = 'smem constant byte address 0x4 - core index']
  #allocation1 [shape = 'u32[72,128]{1,0:T(1,128)}', space=vmem, size = 0x9000, scoped, tag = 'internal scratch']
  #allocation2 [shape = 'f32[2,128]{1,0:T(2,128)}', space=vmem, size = 0x400, scoped, tag = 'scratch operand']
  %s0 = inlined_call_operand.vmem [shape: f32[2,32], index: 0, kind: input, shape index: {}]
  %s1 = inlined_call_operand.vmem [shape: f32[2,32], index: 1, kind: input, shape index: {}]
  %s2 = inlined_call_operand.hbm [shape: bf16[32,32], index: 2, kind: input, shape index: {}]
  %s3 = inlined_call_operand.hbm [shape: bf16[32,128], index: 3, kind: input, shape index: {}]
  %s4 = inlined_call_operand.hbm [shape: f32[1,128], index: 4, kind: input, shape index: {}]
  %s5 = inlined_call_operand.hbm [shape: bf16[128,128], index: 5, kind: input, shape index: {}]
  %s6 = inlined_call_operand.hbm [shape: f32[1,128], index: 6, kind: input, shape index: {}]
  %s7 = inlined_call_operand.hbm [shape: f32[2,128], index: 7, kind: output, shape index: {}]
  %s8 = sld [smem:[#allocation0]]
  $region62: #{timestep_embedding_fwd.1} parent=0
    _
  %s10 = ssub.s32 1, %s8
  %s11 = scalar_select 0, %s10, %s8
  $region1: #{timestep_embedding_fwd.1} parent=0
    #allocation3 [shape = 'u8[8192]{0}', space=vmem, size = 0x2000, scoped, tag = 'input window, operand 2, single buffered']
    #allocation4 [shape = 's32[1]{0}', space=sflag, size = 0x4, scoped, tag = 'scoped memory for timestep_embedding_fwd.1']
    #allocation5 [shape = 's32[1]{0}', space=sflag, size = 0x4, scoped, tag = 'scoped memory for timestep_embedding_fwd.1']
    #allocation6 [shape = 'u8[8192]{0}', space=vmem, size = 0x2000, scoped, tag = 'input window, operand 3, single buffered']
    #allocation7 [shape = 's32[1]{0}', space=sflag, size = 0x4, scoped, tag = 'scoped memory for timestep_embedding_fwd.1']
    #allocation8 [shape = 'u8[512]{0}', space=vmem, size = 0x400, scoped, tag = 'input window, operand 4, single buffered']
    #allocation9 [shape = 'u8[32768]{0}', space=vmem, size = 0x8000, scoped, tag = 'input window, operand 5, single buffered']
    #allocation10 [shape = 's32[1]{0}', space=sflag, size = 0x4, scoped, tag = 'scoped memory for timestep_embedding_fwd.1']
    #allocation11 [shape = 'u8[512]{0}', space=vmem, size = 0x400, scoped, tag = 'input window, operand 6, single buffered']
    #allocation12 [shape = 'u8[1024]{0}', space=vmem, size = 0x400, scoped, tag = 'output window, operand 0, single buffered']
    %12 = vsyncpa [#allocation4], 0
    %13 = vsyncpa [#allocation7], 0
    %14 = vsyncpa [#allocation10], 0
    %15 = vsyncpa [#allocation5], 0
    // Predicated region
    $region2: #{timestep_embedding_fwd.1} parent=1 // pred_check
      _
    $region3: #{timestep_embedding_fwd.1} parent=1 // pred_check_branch
      %17 = sbr.rel (0) target = $region5
    $region4: #{timestep_embedding_fwd.1} parent=1 // pred_region
      _
    $region5: #{timestep_embedding_fwd.1} parent=1 // pred_fallthru
      _
    // Predicated region
    $region6: #{timestep_embedding_fwd.1} parent=1 // pred_check
      _
    $region7: #{timestep_embedding_fwd.1} parent=1 // pred_check_branch
      %19 = sbr.rel (0) target = $region9
    $region8: #{timestep_embedding_fwd.1} parent=1 // pred_region
      _
    $region9: #{timestep_embedding_fwd.1} parent=1 // pred_fallthru
      _
    // Predicated region
    $region10: #{timestep_embedding_fwd.1} parent=1 // pred_check
      _
    $region11: #{timestep_embedding_fwd.1} parent=1 // pred_check_branch
      %21 = sbr.rel (0) target = $region13
    $region12: #{timestep_embedding_fwd.1} parent=1 // pred_region
      %23 = vsyncadd [#allocation4], 0
      %s24 = sshll.u32 %s2, 4
      %s25 = int_to_ptr.hbm [resolvable:$true] %s24
      %s26 = sshll.u32 [#allocation3], 4
      %s27 = int_to_ptr.vmem [resolvable:$true] %s26
      %32 = dma.hbm_to_vmem [thread:$0]  %s25, 256, %s27, [#allocation4], 64, 64, 4
    $region13: #{timestep_embedding_fwd.1} parent=1 // pred_fallthru
      _
    // Predicated region
    $region14: #{timestep_embedding_fwd.1} parent=1 // pred_check
      _
    $region15: #{timestep_embedding_fwd.1} parent=1 // pred_check_branch
      %34 = sbr.rel (0) target = $region17
    $region16: #{timestep_embedding_fwd.1} parent=1 // pred_region
      %36 = vsyncadd [#allocation7], 0
      %s37 = sshll.u32 %s3, 4
      %s38 = int_to_ptr.hbm [resolvable:$true] %s37
      %s39 = sshll.u32 [#allocation6], 4
      %s40 = int_to_ptr.vmem [resolvable:$true] %s39
      %45 = dma.hbm_to_vmem [thread:$0]  %s38, 256, %s40, [#allocation7], 64, 64, 4
    $region17: #{timestep_embedding_fwd.1} parent=1 // pred_fallthru
      _
    // Predicated region
    $region18: #{timestep_embedding_fwd.1} parent=1 // pred_check
      _
    $region19: #{timestep_embedding_fwd.1} parent=1 // pred_check_branch
      %47 = sbr.rel (0) target = $region21
    $region20: #{timestep_embedding_fwd.1} parent=1 // pred_region
      %49 = vsyncadd [#allocation7], 0
      %s51 = sshll.u32 %s4, 4
      %s52 = int_to_ptr.hbm [resolvable:$true] %s51
      %s53 = sshll.u32 [#allocation8], 4
      %s54 = int_to_ptr.vmem [resolvable:$true] %s53
      %56 = dma.hbm_to_vmem [thread:$0]  %s52, 16, %s54, [#allocation7]
    $region21: #{timestep_embedding_fwd.1} parent=1 // pred_fallthru
      _
    // Predicated region
    $region22: #{timestep_embedding_fwd.1} parent=1 // pred_check
      _
    $region23: #{timestep_embedding_fwd.1} parent=1 // pred_check_branch
      %58 = sbr.rel (0) target = $region25
    $region24: #{timestep_embedding_fwd.1} parent=1 // pred_region
      %60 = vsyncadd [#allocation10], 0
      %s61 = sshll.u32 %s5, 4
      %s62 = int_to_ptr.hbm [resolvable:$true] %s61
      %s63 = sshll.u32 [#allocation9], 4
      %s64 = int_to_ptr.vmem [resolvable:$true] %s63
      %69 = dma.hbm_to_vmem [thread:$0]  %s62, 1024, %s64, [#allocation10], 64, 64, 4
    $region25: #{timestep_embedding_fwd.1} parent=1 // pred_fallthru
      _
    // Predicated region
    $region26: #{timestep_embedding_fwd.1} parent=1 // pred_check
      _
    $region27: #{timestep_embedding_fwd.1} parent=1 // pred_check_branch
      %71 = sbr.rel (0) target = $region29
    $region28: #{timestep_embedding_fwd.1} parent=1 // pred_region
      %73 = vsyncadd [#allocation10], 0
      %s75 = sshll.u32 %s6, 4
      %s76 = int_to_ptr.hbm [resolvable:$true] %s75
      %s77 = sshll.u32 [#allocation11], 4
      %s78 = int_to_ptr.vmem [resolvable:$true] %s77
      %80 = dma.hbm_to_vmem [thread:$0]  %s76, 16, %s78, [#allocation10]
    $region29: #{timestep_embedding_fwd.1} parent=1 // pred_fallthru
      _
    // Predicated region
    $region30: #{timestep_embedding_fwd.1} parent=1 // pred_check
      _
    $region31: #{timestep_embedding_fwd.1} parent=1 // pred_check_branch
      %82 = sbr.rel (0) target = $region33
    $region32: #{timestep_embedding_fwd.1} parent=1 // pred_region
      %84 = dma.done [#allocation4], 256
    $region33: #{timestep_embedding_fwd.1} parent=1 // pred_fallthru
      _
    // Predicated region
    $region34: #{timestep_embedding_fwd.1} parent=1 // pred_check
      _
    $region35: #{timestep_embedding_fwd.1} parent=1 // pred_check_branch
      %86 = sbr.rel (0) target = $region37
    $region36: #{timestep_embedding_fwd.1} parent=1 // pred_region
      %88 = dma.done [#allocation7], 256
    $region37: #{timestep_embedding_fwd.1} parent=1 // pred_fallthru
      _
    // Predicated region
    $region38: #{timestep_embedding_fwd.1} parent=1 // pred_check
      _
    $region39: #{timestep_embedding_fwd.1} parent=1 // pred_check_branch
      %90 = sbr.rel (0) target = $region41
    $region40: #{timestep_embedding_fwd.1} parent=1 // pred_region
      %92 = dma.done [#allocation7], 16
    $region41: #{timestep_embedding_fwd.1} parent=1 // pred_fallthru
      _
    // Predicated region
    $region42: #{timestep_embedding_fwd.1} parent=1 // pred_check
      _
    $region43: #{timestep_embedding_fwd.1} parent=1 // pred_check_branch
      %94 = sbr.rel (0) target = $region45
    $region44: #{timestep_embedding_fwd.1} parent=1 // pred_region
      %96 = dma.done [#allocation10], 1024
    $region45: #{timestep_embedding_fwd.1} parent=1 // pred_fallthru
      _
    // Predicated region
    $region46: #{timestep_embedding_fwd.1} parent=1 // pred_check
      _
    $region47: #{timestep_embedding_fwd.1} parent=1 // pred_check_branch
      %98 = sbr.rel (0) target = $region49
    $region48: #{timestep_embedding_fwd.1} parent=1 // pred_region
      %100 = dma.done [#allocation10], 16
    $region49: #{timestep_embedding_fwd.1} parent=1 // pred_fallthru
      _
    %p102 = scmp.eq.s32.totalorder 0, 0
    // Predicated region
    $region50: #{timestep_embedding_fwd.1} parent=1 // pred_check
      %p103 = pneg %p102
    $region51: #{timestep_embedding_fwd.1} parent=1 // pred_check_branch
      %105 = sbr.rel (%p103) target = $region53
    $region52: #{timestep_embedding_fwd.1} parent=1 // pred_region
      %v106 = vld [vmem:[%s0] sm:$0x3]
      %v107 = vld [vmem:[%s1] sm:$0x3]
      %v108 = vpack.c.bf16 %v107, %v107
      %v109 = vld [vmem:[#allocation3] sm:$0xf]
      %v110 = vld [vmem:[#allocation3 + $0x4] sm:$0xf]
      %v111 = vld [vmem:[#allocation3 + $0x8] sm:$0xf]
      %v112 = vld [vmem:[#allocation3 + $0xc] sm:$0xf]
      %v117 = vunpack.c.l.b16 %v109
      %v118 = vunpack.c.l.b16 %v110
      %v119 = vunpack.c.l.b16 %v111
      %v120 = vunpack.c.l.b16 %v112
      %v121 = vpack.c.b16 %v118, %v117
      %v122 = vpack.c.b16 %v120, %v119
      %vm125 = vcmask 261120
      %v127 = vsel %vm125, %v108, 0
      %129 = vmatpush.bf16.msra.mxu0 0
      %130 = vmatpush.bf16.msra.mxu0 0
      %131 = vmatpush.bf16.msra.mxu0 0
      %132 = vmatpush.bf16.msra.mxu0 0
      %133 = vmatpush.bf16.msra.mxu0 0
      %134 = vmatpush.bf16.msra.mxu0 0
      %135 = vmatpush.bf16.msra.mxu0 %v122
      %136 = vmatpush.bf16.msra.mxu0 %v121
      %137 = vmatmul.bf16.gmra.mxu0 %v127
      %v138 = vpop.f32.mrf.mxu0
      %v139 = vadd.f32 0.0, %v138
      %v140 = vpop.f32.mrf.mxu0
      %141 = vdwg.mxu0
      %v142 = vadd.f32 %v106, %v139
      %v143 = vpack.c.bf16 %v142, %v142
      %v144 = vld [vmem:[#allocation6] sm:$0xf]
      %v145 = vld [vmem:[#allocation6 + $0x4] sm:$0xf]
      %v146 = vld [vmem:[#allocation6 + $0x8] sm:$0xf]
      %v147 = vld [vmem:[#allocation6 + $0xc] sm:$0xf]
      %v148 = vld [vmem:[#allocation8] sm:$0x1]
      %v150 = vperm.slane %v148, 0
      %v156 = vunpack.c.l.b16 %v144
      %v157 = vunpack.c.l.b16 %v145
      %v158 = vunpack.c.l.b16 %v146
      %v159 = vunpack.c.l.b16 %v147
      %v160 = vpack.c.b16 %v157, %v156
      %v161 = vpack.c.b16 %v159, %v158
      %v165 = vsel %vm125, %v143, 0
      %167 = vmatpush.bf16.msra.mxu0 0
      %168 = vmatpush.bf16.msra.mxu0 0
      %169 = vmatpush.bf16.msra.mxu0 0
      %170 = vmatpush.bf16.msra.mxu0 0
      %171 = vmatpush.bf16.msra.mxu0 0
      %172 = vmatpush.bf16.msra.mxu0 0
      %173 = vmatpush.bf16.msra.mxu0 %v161
      %174 = vmatpush.bf16.msra.mxu0 %v160
      %175 = vmatmul.bf16.gmra.mxu0 %v165
      %v176 = vpop.f32.mrf.mxu0
      %v177 = vadd.f32 %v150, %v176
      %v178 = vpop.f32.mrf.mxu0
      %179 = vdwg.mxu0
      %v180 = vsub.f32 0.0, %v177
      %v181 = vmul.f32 %v180, 1.442695
      %v182 = vpow.pop %v181
      %v183 = vadd.f32 %v182, 1.0
      %v184 = vrcp.pop %v183
      %v185 = vmul.f32 %v177, %v184
      %186 = vst [vmem:[#allocation2] sm:$0x3] %v185
    $region53: #{timestep_embedding_fwd.1} parent=1 // pred_fallthru
      _
    %v187 = vld [vmem:[#allocation2] sm:$0x3]
    %v188 = vpack.c.bf16 %v187, %v187
    %v189 = vld [vmem:[#allocation9] sm:$0xf]
    %v190 = vld [vmem:[#allocation9 + $0x4] sm:$0xf]
    %v191 = vld [vmem:[#allocation9 + $0x8] sm:$0xf]
    %v192 = vld [vmem:[#allocation9 + $0xc] sm:$0xf]
    %v193 = vld [vmem:[#allocation9 + $0x10] sm:$0xf]
    %v194 = vld [vmem:[#allocation9 + $0x14] sm:$0xf]
    %v195 = vld [vmem:[#allocation9 + $0x18] sm:$0xf]
    %v196 = vld [vmem:[#allocation9 + $0x1c] sm:$0xf]
    %v197 = vld [vmem:[#allocation9 + $0x20] sm:$0xf]
    %v198 = vld [vmem:[#allocation9 + $0x24] sm:$0xf]
    %v199 = vld [vmem:[#allocation9 + $0x28] sm:$0xf]
    %v200 = vld [vmem:[#allocation9 + $0x2c] sm:$0xf]
    %v201 = vld [vmem:[#allocation9 + $0x30] sm:$0xf]
    %v202 = vld [vmem:[#allocation9 + $0x34] sm:$0xf]
    %v203 = vld [vmem:[#allocation9 + $0x38] sm:$0xf]
    %v204 = vld [vmem:[#allocation9 + $0x3c] sm:$0xf]
    %v205 = vld [vmem:[#allocation11] sm:$0x1]
    %v207 = vperm.slane %v205, 0
    %v225 = vunpack.c.l.b16 %v189
    %v226 = vunpack.c.l.b16 %v190
    %v227 = vunpack.c.l.b16 %v191
    %v228 = vunpack.c.l.b16 %v192
    %v229 = vunpack.c.l.b16 %v193
    %v230 = vunpack.c.l.b16 %v194
    %v231 = vunpack.c.l.b16 %v195
    %v232 = vunpack.c.l.b16 %v196
    %v233 = vunpack.c.l.b16 %v197
    %v234 = vunpack.c.l.b16 %v198
    %v235 = vunpack.c.l.b16 %v199
    %v236 = vunpack.c.l.b16 %v200
    %v237 = vunpack.c.l.b16 %v201
    %v238 = vunpack.c.l.b16 %v202
    %v239 = vunpack.c.l.b16 %v203
    %v240 = vunpack.c.l.b16 %v204
    %v241 = vpack.c.b16 %v226, %v225
    %v242 = vpack.c.b16 %v228, %v227
    %v243 = vpack.c.b16 %v230, %v229
    %v244 = vpack.c.b16 %v232, %v231
    %v245 = vpack.c.b16 %v234, %v233
    %v246 = vpack.c.b16 %v236, %v235
    %v247 = vpack.c.b16 %v238, %v237
    %v248 = vpack.c.b16 %v240, %v239
    %257 = vmatpush.bf16.msra.mxu0 %v248
    %258 = vmatpush.bf16.msra.mxu0 %v247
    %259 = vmatpush.bf16.msra.mxu0 %v246
    %260 = vmatpush.bf16.msra.mxu0 %v245
    %261 = vmatpush.bf16.msra.mxu0 %v244
    %262 = vmatpush.bf16.msra.mxu0 %v243
    %263 = vmatpush.bf16.msra.mxu0 %v242
    %264 = vmatpush.bf16.msra.mxu0 %v241
    %265 = vmatmul.bf16.gmra.mxu0 %v188
    %v266 = vpop.f32.mrf.mxu0
    %v267 = vadd.f32 %v207, %v266
    %v268 = vpop.f32.mrf.mxu0
    %269 = vdwg.mxu0
    %270 = vst [vmem:[#allocation12] sm:$0x3] %v267
    // Predicated region
    $region54: #{timestep_embedding_fwd.1} parent=1 // pred_check
      _
    $region55: #{timestep_embedding_fwd.1} parent=1 // pred_check_branch
      %272 = sbr.rel (0) target = $region57
    $region56: #{timestep_embedding_fwd.1} parent=1 // pred_region
      %274 = vsyncadd [#allocation5], 0
      %s276 = sshll.u32 [#allocation12], 4
      %s277 = int_to_ptr.vmem [resolvable:$true] %s276
      %s278 = sshll.u32 %s7, 4
      %s279 = int_to_ptr.hbm [resolvable:$true] %s278
      %281 = dma.vmem_to_hbm [thread:$0]  %s277, 32, %s279, [#allocation5]
    $region57: #{timestep_embedding_fwd.1} parent=1 // pred_fallthru
      _
    // Predicated region
    $region58: #{timestep_embedding_fwd.1} parent=1 // pred_check
      _
    $region59: #{timestep_embedding_fwd.1} parent=1 // pred_check_branch
      %283 = sbr.rel (0) target = $region61
    $region60: #{timestep_embedding_fwd.1} parent=1 // pred_region
      %285 = dma.done [#allocation5], 32
    $region61: #{timestep_embedding_fwd.1} parent=1 // pred_fallthru
      _
    %286 = vsyncpa [#allocation4], 1
    %287 = vsyncpa [#allocation7], 1
    %288 = vsyncpa [#allocation10], 1
    %289 = vsyncpa [#allocation5], 1

</llo_original>
